<compile_context>
chip_gen: v7x
topology: tpu7x:2x2x1
jax: 0.10.0
libtpu: 0.0.40
codegen_flags: <defaults>
</compile_context>

<pallas_src>
import inspect
import math

import jax
import jax.numpy as jnp
from jax.experimental import pallas as pl
from jax.experimental.pallas import tpu as pltpu


_LANE = 128      # last dim of padded feature blocks
_SUBLANE = 8     # row-tile granularity

_BLOCKSPEC_HAS_PIPELINE_MODE = (
    "pipeline_mode" in inspect.signature(pl.BlockSpec).parameters
    and hasattr(pl, "Buffered")
)

_SQRT_2_OVER_PI = math.sqrt(2.0 / math.pi)


def _round_up(n, m):
    return ((n + m - 1) // m) * m


def _gelu_tanh(x):
    # Tanh-approximate GELU: tanh runs on the EUP (own bundle slot) instead of
    # the erf VALU polynomial. Divergence from exact GELU is below the bf16
    # matmul noise floor of this kernel.
    return 0.5 * x * (1.0 + jnp.tanh(_SQRT_2_OVER_PI * (x + 0.044715 * (x * x * x))))


def _pad2d(a, rows, cols):
    r, c = a.shape
    if r == rows and c == cols:
        return a
    return jnp.pad(a, ((0, rows - r), (0, cols - c)))


def _resident_spec(shape):
    """VMEM-resident operand: constant index_map, single-buffered."""
    if _BLOCKSPEC_HAS_PIPELINE_MODE:
        return pl.BlockSpec(shape, lambda i: (0, 0), pipeline_mode=pl.Buffered(1))
    return pl.BlockSpec(shape, lambda i: (0, 0))


def _choose_tiling(N, F, Hp, Cp):
    """Pick (tile_n, vmem_limit_bytes) from the chip's physical VMEM."""
    try:
        vmem_cap = int(pltpu.get_tpu_info().vmem_capacity_bytes)
    except Exception:
        vmem_cap = 64 * 1024 * 1024  # conservative (v7x-sized) fallback

    if vmem_cap >= 100 * 1024 * 1024:        # v5e / v6e: 128 MiB physical
        vmem_limit = 96 * 1024 * 1024
        tile_n_max = 512
    else:                                    # v7x: 64 MiB physical per TC
        vmem_limit = 48 * 1024 * 1024
        tile_n_max = 256

    # Resident bytes: bf16 weights (single-buffered) + f32 biases.
    resident = 2 * (F * Hp + Hp * Hp + Hp * Cp) + 4 * (2 * Hp + Cp)
    # Per-row bytes: f32 x (2 pipeline bufs) + f32 out (2 bufs) + ~2 live f32
    # activation tiles of width Hp.
    per_row = 2 * 4 * F + 2 * 4 * Cp + 2 * 4 * Hp
    budget = int(0.8 * vmem_limit) - resident
    tile_cap = max(_SUBLANE, (budget // max(per_row, 1)) // _SUBLANE * _SUBLANE)

    # Split the token dim into >= 2 tiles when possible so a "parallel" grid
    # axis actually gives both v7x TensorCores work.
    two_way = _round_up(pl.cdiv(N, 2), _SUBLANE)

    tile_n = max(_SUBLANE, min(tile_n_max, tile_cap, two_way))
    return tile_n, vmem_limit


def _make_kernel(n_sub, sub_rows):
    def mlp_kernel(x_ref, w1_ref, b1_ref, w2_ref, b2_ref, w3_ref, b3_ref, o_ref):
        # Weights / biases are VMEM-resident; load once per grid step.
        w1 = w1_ref[...]
        w2 = w2_ref[...]
        w3 = w3_ref[...]
        b1 = b1_ref[...]
        b2 = b2_ref[...]
        b3 = b3_ref[...]

        # Two independent half-tiles let the scheduler overlap one half's MXU
        # matmuls with the other half's GELU (n_sub == 1 for small tiles).
        for j in range(n_sub):
            rows = pl.ds(j * sub_rows, sub_rows)   # static slice (zero cost)
            x = x_ref[rows, :].astype(jnp.bfloat16)   # cast in-kernel (no wrapper pass)

            # fc1 + GELU (+ dropout == identity in eval mode)
            h = jnp.dot(x, w1, preferred_element_type=jnp.float32) + b1
            h = _gelu_tanh(h)
            # TODO(synk): training-mode dropout would need pltpu.prng_seed +
            # pltpu.stateful_bernoulli masks here and after fc2.

            # fc2 + GELU (+ dropout == identity in eval mode)
            h = jnp.dot(h.astype(jnp.bfloat16), w2,
                        preferred_element_type=jnp.float32) + b2
            h = _gelu_tanh(h)

            # fc3
            o_ref[rows, :] = (jnp.dot(h.astype(jnp.bfloat16), w3,
                                      preferred_element_type=jnp.float32)
                              + b3).astype(o_ref.dtype)

    return mlp_kernel


def mlp_forward(x, params):
    """x: [B, S, fpn_size] float32. Returns [B, S, num_class] float32."""
    w1, b1, w2, b2, w3, b3 = params
    B, S, F = x.shape
    H = w1.shape[1]
    C = w3.shape[1]
    N = B * S

    # Hidden / output feature dims padded to lane multiples (dense MXU passes,
    # lane-dense output stores). Zero rows/cols are mathematically exact.
    Hp = _round_up(H, _LANE)
    Cp = _round_up(C, _LANE)

    tile_n, vmem_limit = _choose_tiling(N, F, Hp, Cp)
    grid = (pl.cdiv(N, tile_n),)
    n_sub = 2 if (tile_n >= 256 and tile_n % 16 == 0) else 1
    sub_rows = tile_n // n_sub

    # Activations: no pad, no cast, no extra HBM round trip (reshape is free).
    x2d = x.reshape(N, F)

    # Weights are tiny and padded once; bf16 operands (MXU native), f32 biases.
    w1p = _pad2d(w1, F, Hp).astype(jnp.bfloat16)
    w2p = _pad2d(w2, Hp, Hp).astype(jnp.bfloat16)
    w3p = _pad2d(w3, Hp, Cp).astype(jnp.bfloat16)
    b1p = _pad2d(b1, 1, Hp)
    b2p = _pad2d(b2, 1, Hp)
    b3p = _pad2d(b3, 1, Cp)

    flops = 2 * N * (F * Hp + Hp * Hp + Hp * Cp)
    bytes_accessed = (N * F * 4
                      + (w1p.size + w2p.size + w3p.size) * 2
                      + (b1p.size + b2p.size + b3p.size) * 4
                      + N * Cp * 4)

    out = pl.pallas_call(
        _make_kernel(n_sub, sub_rows),
        out_shape=jax.ShapeDtypeStruct((N, Cp), jnp.float32),
        grid_spec=pltpu.PrefetchScalarGridSpec(
            num_scalar_prefetch=0,
            grid=grid,
            in_specs=[
                pl.BlockSpec((tile_n, F), lambda i: (i, 0)),   # x rows: streamed f32
                _resident_spec(w1p.shape), _resident_spec(b1p.shape),
                _resident_spec(w2p.shape), _resident_spec(b2p.shape),
                _resident_spec(w3p.shape), _resident_spec(b3p.shape),
            ],
            out_specs=pl.BlockSpec((tile_n, Cp), lambda i: (i, 0)),
        ),
        compiler_params=pltpu.CompilerParams(
            dimension_semantics=("parallel",),   # row tiles shard across TCs (v7x)
            vmem_limit_bytes=vmem_limit,
        ),
        cost_estimate=pl.CostEstimate(
            flops=flops,
            transcendentals=2 * N * Hp,
            bytes_accessed=bytes_accessed,
        ),
    )(x2d, w1p, b1p, w2p, b2p, w3p, b3p)

    return out[:, :C].reshape(B, S, C)


def init_params(key, fpn_size, mlp_dim, num_class):
    """Deterministic init matching the PyTorch _init_weights:
    xavier_uniform_ for weights, normal(std=1e-6) for biases.
    Weights stored transposed as [in, out]; biases as [1, out]."""
    ks = jax.random.split(key, 6)

    def xavier(k, fan_in, fan_out):
        bound = math.sqrt(6.0 / (fan_in + fan_out))
        return jax.random.uniform(k, (fan_in, fan_out), jnp.float32,
                                  minval=-bound, maxval=bound)

    w1 = xavier(ks[0], fpn_size, mlp_dim)
    b1 = 1e-6 * jax.random.normal(ks[1], (1, mlp_dim), jnp.float32)
    w2 = xavier(ks[2], mlp_dim, mlp_dim)
    b2 = 1e-6 * jax.random.normal(ks[3], (1, mlp_dim), jnp.float32)
    w3 = xavier(ks[4], mlp_dim, num_class)
    b3 = 1e-6 * jax.random.normal(ks[5], (1, num_class), jnp.float32)
    return (w1, b1, w2, b2, w3, b3)


def mlp_reference(x, params):
    """Pure-JAX reference with the same numerics contract as the kernel
    (bf16 matmul operands, f32 accumulation, f32 bias + tanh-GELU)."""
    w1, b1, w2, b2, w3, b3 = params
    h = jnp.dot(x.astype(jnp.bfloat16), w1.astype(jnp.bfloat16),
                preferred_element_type=jnp.float32) + b1[0]
    h = _gelu_tanh(h)
    h = jnp.dot(h.astype(jnp.bfloat16), w2.astype(jnp.bfloat16),
                preferred_element_type=jnp.float32) + b2[0]
    h = _gelu_tanh(h)
    return jnp.dot(h.astype(jnp.bfloat16), w3.astype(jnp.bfloat16),
                   preferred_element_type=jnp.float32) + b3[0]


if __name__ == "__main__":
    B, S = 2, 8            # batch, sequence of tokens
    fpn_size = 32          # input feature dim
    mlp_dim = 32           # hidden dim
    num_class = 16         # output classes

    key = jax.random.PRNGKey(0)
    kx, kp = jax.random.split(key)
    x = jax.random.normal(kx, (B, S, fpn_size), jnp.float32)
    params = init_params(kp, fpn_size, mlp_dim, num_class)

    fwd = jax.jit(mlp_forward)
    out = jax.block_until_ready(fwd(x, params))
    ref = mlp_reference(x, params)

    assert out.shape == (B, S, num_class)
    assert jnp.allclose(out, ref, atol=1e-3, rtol=1e-3), "mismatch vs reference"

    print("KERNEL_OK")
</pallas_src>

<mosaic_0001>
module attributes {stable_mosaic.version = 11 : i64} {
  func.func @mlp_kernel(%arg0: i32, %arg1: memref<8x32xf32, #tpu.memory_space<vmem>>, %arg2: memref<32x128xbf16, #tpu.memory_space<vmem>>, %arg3: memref<1x128xf32, #tpu.memory_space<vmem>>, %arg4: memref<128x128xbf16, #tpu.memory_space<vmem>>, %arg5: memref<1x128xf32, #tpu.memory_space<vmem>>, %arg6: memref<128x128xbf16, #tpu.memory_space<vmem>>, %arg7: memref<1x128xf32, #tpu.memory_space<vmem>>, %arg8: memref<8x128xf32, #tpu.memory_space<vmem>>) attributes {dimension_semantics = [#tpu.dimension_semantics<parallel>], iteration_bounds = array<i64: 2>, scalar_prefetch = 0 : i64, scratch_operands = 0 : i64, tpu.core_type = #tpu.core_type<tc>, window_params = [{transform_indices = @transform_0, window_bounds = array<i64: 8, 32>}, {pipeline_mode = #tpu.pipeline_mode<synchronous>, transform_indices = @transform_1, window_bounds = array<i64: 32, 128>}, {pipeline_mode = #tpu.pipeline_mode<synchronous>, transform_indices = @transform_2, window_bounds = array<i64: 1, 128>}, {pipeline_mode = #tpu.pipeline_mode<synchronous>, transform_indices = @transform_3, window_bounds = array<i64: 128, 128>}, {pipeline_mode = #tpu.pipeline_mode<synchronous>, transform_indices = @transform_4, window_bounds = array<i64: 1, 128>}, {pipeline_mode = #tpu.pipeline_mode<synchronous>, transform_indices = @transform_5, window_bounds = array<i64: 128, 128>}, {pipeline_mode = #tpu.pipeline_mode<synchronous>, transform_indices = @transform_6, window_bounds = array<i64: 1, 128>}, {transform_indices = @transform_7, window_bounds = array<i64: 8, 128>}]} {
    %c0 = arith.constant 0 : index
    %c0_0 = arith.constant 0 : index
    %0 = vector.load %arg2[%c0, %c0_0] : memref<32x128xbf16, #tpu.memory_space<vmem>>, vector<32x128xbf16>
    %c0_1 = arith.constant 0 : index
    %c0_2 = arith.constant 0 : index
    %1 = vector.load %arg4[%c0_1, %c0_2] : memref<128x128xbf16, #tpu.memory_space<vmem>>, vector<128x128xbf16>
    %c0_3 = arith.constant 0 : index
    %c0_4 = arith.constant 0 : index
    %2 = vector.load %arg6[%c0_3, %c0_4] : memref<128x128xbf16, #tpu.memory_space<vmem>>, vector<128x128xbf16>
    %c0_5 = arith.constant 0 : index
    %c0_6 = arith.constant 0 : index
    %3 = vector.load %arg3[%c0_5, %c0_6] : memref<1x128xf32, #tpu.memory_space<vmem>>, vector<1x128xf32>
    %c0_7 = arith.constant 0 : index
    %c0_8 = arith.constant 0 : index
    %4 = vector.load %arg5[%c0_7, %c0_8] : memref<1x128xf32, #tpu.memory_space<vmem>>, vector<1x128xf32>
    %c0_9 = arith.constant 0 : index
    %c0_10 = arith.constant 0 : index
    %5 = vector.load %arg7[%c0_9, %c0_10] : memref<1x128xf32, #tpu.memory_space<vmem>>, vector<1x128xf32>
    %c0_11 = arith.constant 0 : index
    %c0_12 = arith.constant 0 : index
    %6 = vector.load %arg1[%c0_11, %c0_12] : memref<8x32xf32, #tpu.memory_space<vmem>>, vector<8x32xf32>
    %7 = arith.truncf %6 : vector<8x32xf32> to vector<8x32xbf16>
    %cst = arith.constant dense<0.000000e+00> : vector<8x128xf32>
    %8 = tpu.matmul %7, %0, %cst {dimension_numbers = #tpu.dot_dimension_numbers<[1], [0], [0], [1], [0, 0, 1, 1], [], []>} : vector<8x32xbf16>, vector<32x128xbf16>, vector<8x128xf32> -> vector<8x128xf32>
    %9 = vector.broadcast %3 : vector<1x128xf32> to vector<8x128xf32>
    %10 = arith.addf %8, %9 : vector<8x128xf32>
    %cst_13 = arith.constant 5.000000e-01 : f32
    %11 = vector.broadcast %cst_13 : f32 to vector<8x128xf32>
    %12 = arith.mulf %11, %10 : vector<8x128xf32>
    %13 = arith.mulf %10, %10 : vector<8x128xf32>
    %14 = arith.mulf %13, %10 : vector<8x128xf32>
    %cst_14 = arith.constant 4.471500e-02 : f32
    %15 = vector.broadcast %cst_14 : f32 to vector<8x128xf32>
    %16 = arith.mulf %15, %14 : vector<8x128xf32>
    %17 = arith.addf %10, %16 : vector<8x128xf32>
    %cst_15 = arith.constant 0.797884583 : f32
    %18 = vector.broadcast %cst_15 : f32 to vector<8x128xf32>
    %19 = arith.mulf %18, %17 : vector<8x128xf32>
    %20 = math.tanh %19 : vector<8x128xf32>
    %cst_16 = arith.constant 1.000000e+00 : f32
    %21 = vector.broadcast %cst_16 : f32 to vector<8x128xf32>
    %22 = arith.addf %21, %20 : vector<8x128xf32>
    %23 = arith.mulf %12, %22 : vector<8x128xf32>
    %24 = arith.truncf %23 : vector<8x128xf32> to vector<8x128xbf16>
    %cst_17 = arith.constant dense<0.000000e+00> : vector<8x128xf32>
    %25 = tpu.matmul %24, %1, %cst_17 {dimension_numbers = #tpu.dot_dimension_numbers<[1], [0], [0], [1], [0, 0, 1, 1], [], []>} : vector<8x128xbf16>, vector<128x128xbf16>, vector<8x128xf32> -> vector<8x128xf32>
    %26 = vector.broadcast %4 : vector<1x128xf32> to vector<8x128xf32>
    %27 = arith.addf %25, %26 : vector<8x128xf32>
    %cst_18 = arith.constant 5.000000e-01 : f32
    %28 = vector.broadcast %cst_18 : f32 to vector<8x128xf32>
    %29 = arith.mulf %28, %27 : vector<8x128xf32>
    %30 = arith.mulf %27, %27 : vector<8x128xf32>
    %31 = arith.mulf %30, %27 : vector<8x128xf32>
    %cst_19 = arith.constant 4.471500e-02 : f32
    %32 = vector.broadcast %cst_19 : f32 to vector<8x128xf32>
    %33 = arith.mulf %32, %31 : vector<8x128xf32>
    %34 = arith.addf %27, %33 : vector<8x128xf32>
    %cst_20 = arith.constant 0.797884583 : f32
    %35 = vector.broadcast %cst_20 : f32 to vector<8x128xf32>
    %36 = arith.mulf %35, %34 : vector<8x128xf32>
    %37 = math.tanh %36 : vector<8x128xf32>
    %cst_21 = arith.constant 1.000000e+00 : f32
    %38 = vector.broadcast %cst_21 : f32 to vector<8x128xf32>
    %39 = arith.addf %38, %37 : vector<8x128xf32>
    %40 = arith.mulf %29, %39 : vector<8x128xf32>
    %41 = arith.truncf %40 : vector<8x128xf32> to vector<8x128xbf16>
    %cst_22 = arith.constant dense<0.000000e+00> : vector<8x128xf32>
    %42 = tpu.matmul %41, %2, %cst_22 {dimension_numbers = #tpu.dot_dimension_numbers<[1], [0], [0], [1], [0, 0, 1, 1], [], []>} : vector<8x128xbf16>, vector<128x128xbf16>, vector<8x128xf32> -> vector<8x128xf32>
    %43 = vector.broadcast %5 : vector<1x128xf32> to vector<8x128xf32>
    %44 = arith.addf %42, %43 : vector<8x128xf32>
    %c0_23 = arith.constant 0 : index
    %c0_24 = arith.constant 0 : index
    %45 = vector.load %arg8[%c0_23, %c0_24] : memref<8x128xf32, #tpu.memory_space<vmem>>, vector<8x128xf32>
    tpu.vector_store %arg8[%c0_23, %c0_24], %44 {strides = array<i32>} : memref<8x128xf32, #tpu.memory_space<vmem>>, vector<8x128xf32>,
    return
  }
  func.func @transform_0(%arg0: i32) -> (i32, i32) {
    %c0_i32 = arith.constant 0 : i32
    %c0_i32_0 = arith.constant 0 : i32
    return %arg0, %c0_i32 : i32, i32
  }
  func.func @transform_1(%arg0: i32) -> (i32, i32) {
    %c0_i32 = arith.constant 0 : i32
    %c0_i32_0 = arith.constant 0 : i32
    %c0_i32_1 = arith.constant 0 : i32
    return %c0_i32, %c0_i32_0 : i32, i32
  }
  func.func @transform_2(%arg0: i32) -> (i32, i32) {
    %c0_i32 = arith.constant 0 : i32
    %c0_i32_0 = arith.constant 0 : i32
    %c0_i32_1 = arith.constant 0 : i32
    return %c0_i32, %c0_i32_0 : i32, i32
  }
  func.func @transform_3(%arg0: i32) -> (i32, i32) {
    %c0_i32 = arith.constant 0 : i32
    %c0_i32_0 = arith.constant 0 : i32
    %c0_i32_1 = arith.constant 0 : i32
    return %c0_i32, %c0_i32_0 : i32, i32
  }
  func.func @transform_4(%arg0: i32) -> (i32, i32) {
    %c0_i32 = arith.constant 0 : i32
    %c0_i32_0 = arith.constant 0 : i32
    %c0_i32_1 = arith.constant 0 : i32
    return %c0_i32, %c0_i32_0 : i32, i32
  }
  func.func @transform_5(%arg0: i32) -> (i32, i32) {
    %c0_i32 = arith.constant 0 : i32
    %c0_i32_0 = arith.constant 0 : i32
    %c0_i32_1 = arith.constant 0 : i32
    return %c0_i32, %c0_i32_0 : i32, i32
  }
  func.func @transform_6(%arg0: i32) -> (i32, i32) {
    %c0_i32 = arith.constant 0 : i32
    %c0_i32_0 = arith.constant 0 : i32
    %c0_i32_1 = arith.constant 0 : i32
    return %c0_i32, %c0_i32_0 : i32, i32
  }
  func.func @transform_7(%arg0: i32) -> (i32, i32) {
    %c0_i32 = arith.constant 0 : i32
    %c0_i32_0 = arith.constant 0 : i32
    return %arg0, %c0_i32 : i32, i32
  }
}

</mosaic_0001>

<llo_original>
// kernel: mlp_forward.1
$region0: #{mlp_forward.1}
  #allocation0 [shape = 'u32[]', space=smem, size = 0x4, offset = 0x4, fixed_abs, tag = 'smem constant byte address 0x4 - core index']
  #allocation1 [shape = 'u32[144,128]{1,0:T(1,128)}', space=vmem, size = 0x12000, scoped, tag = 'internal scratch']
  %s0 = inlined_call_operand.vmem [shape: f32[16,32], index: 0, kind: input, shape index: {}]
  %s1 = inlined_call_operand.vmem [shape: bf16[32,128], index: 1, kind: input, shape index: {}]
  %s2 = inlined_call_operand.vmem [shape: f32[1,128], index: 2, kind: input, shape index: {}]
  %s3 = inlined_call_operand.vmem [shape: bf16[128,128], index: 3, kind: input, shape index: {}]
  %s4 = inlined_call_operand.vmem [shape: f32[1,128], index: 4, kind: input, shape index: {}]
  %s5 = inlined_call_operand.vmem [shape: bf16[128,128], index: 5, kind: input, shape index: {}]
  %s6 = inlined_call_operand.vmem [shape: f32[1,128], index: 6, kind: input, shape index: {}]
  %s7 = inlined_call_operand.vmem [shape: f32[16,128], index: 7, kind: output, shape index: {}]
  %s8 = sld [smem:[#allocation0]]
  $region61: #{mlp_forward.1} parent=0
    _
  %s10 = ssub.s32 1, %s8
  %s11 = scalar_select 0, %s10, %s8
  loop: start=0, step=1, limit=4
  $region2: #{mlp_forward.1} parent=0 // loop_pre_header
    _
  $region3: #{mlp_forward.1} parent=0 // loop_header
    %s13 = sphi 0, %s17
    %p14 = scmp.ge.s32.totalorder %s13, 4
    %s23 = sphi 0, %s25
    %s26 = sphi 0, %s23
    %s27 = sphi 0, %s26
    %s43 = sphi 0, %s27
    %s47 = sphi 0, %s47
    %s49 = sphi 0, %s47
    %s50 = sphi 0, %s49
    %s64 = sphi 0, %s50
    %s68 = sphi 0, %s68
    %s70 = sphi 0, %s68
    %s71 = sphi 0, %s70
    %s85 = sphi 0, %s71
    %s89 = sphi 0, %s89
    %s91 = sphi 0, %s89
    %s92 = sphi 0, %s91
    %s106 = sphi 0, %s92
    %s110 = sphi 0, %s110
    %s112 = sphi 0, %s110
    %s113 = sphi 0, %s112
    %s127 = sphi 0, %s113
    %s131 = sphi 0, %s131
    %s133 = sphi 0, %s131
    %s134 = sphi 0, %s133
    %s148 = sphi 0, %s134
    %s152 = sphi 0, %s152
    %s154 = sphi 0, %s152
    %s155 = sphi 0, %s154
    %s169 = sphi 0, %s155
    %s175 = sphi 0, %s177
    %s178 = sphi 0, %s175
    %s179 = sphi 0, %s178
    %s195 = sphi 0, %s179
  $region4: #{mlp_forward.1} parent=0 // loop_header_branch
    %16 = sbr.rel (%p14) target = $region8
  $region5: #{mlp_forward.1} parent=0 // loop_body
    %s18 = ssub.s32 %s13, 1
    %s19 = ssub.s32 %s13, 2
    %s20 = sadd.s32 %s13, 1
    %s21 = ssub.s32 %s13, %s20
    %p22 = scmp.eq.s32.totalorder %s21, 0
    %s24 = sadd.s32 %s23, 1
    %s25 = scalar_select %p22, %s23, %s24
    %p28 = pneg %p22
    %p29 = scmp.eq.s32.totalorder %s13, 1
    %p30 = por %p28, %p29
    %p31 = scmp.ne.s32.totalorder %s23, %s26
    %p32 = scmp.eq.s32.totalorder %s13, 0
    %p33 = por %p31, %p32
    %p34 = scmp.ne.s32.totalorder %s23, %s26
    %p35 = scmp.eq.s32.totalorder %s18, 1
    %p36 = por %p34, %p35
    %p37 = scmp.ne.s32.totalorder %s26, %s27
    %p38 = scmp.eq.s32.totalorder %s18, 0
    %p39 = por %p37, %p38
    %p40 = scmp.ne.s32.totalorder %s26, %s27
    %p41 = scmp.eq.s32.totalorder %s19, 1
    %p42 = por %p40, %p41
    %p44 = scmp.ne.s32.totalorder %s27, %s43
    %p45 = scmp.eq.s32.totalorder %s19, 0
    %p46 = por %p44, %p45
    %s48 = sadd.s32 %s47, 1
    %p51 = scmp.eq.s32.totalorder %s13, 1
    %p52 = scmp.ne.s32.totalorder %s47, %s49
    %p53 = scmp.eq.s32.totalorder %s13, 0
    %p54 = por %p52, %p53
    %p55 = scmp.ne.s32.totalorder %s47, %s49
    %p56 = scmp.eq.s32.totalorder %s18, 1
    %p57 = por %p55, %p56
    %p58 = scmp.ne.s32.totalorder %s49, %s50
    %p59 = scmp.eq.s32.totalorder %s18, 0
    %p60 = por %p58, %p59
    %p61 = scmp.ne.s32.totalorder %s49, %s50
    %p62 = scmp.eq.s32.totalorder %s19, 1
    %p63 = por %p61, %p62
    %p65 = scmp.ne.s32.totalorder %s50, %s64
    %p66 = scmp.eq.s32.totalorder %s19, 0
    %p67 = por %p65, %p66
    %s69 = sadd.s32 %s68, 1
    %p72 = scmp.eq.s32.totalorder %s13, 1
    %p73 = scmp.ne.s32.totalorder %s68, %s70
    %p74 = scmp.eq.s32.totalorder %s13, 0
    %p75 = por %p73, %p74
    %p76 = scmp.ne.s32.totalorder %s68, %s70
    %p77 = scmp.eq.s32.totalorder %s18, 1
    %p78 = por %p76, %p77
    %p79 = scmp.ne.s32.totalorder %s70, %s71
    %p80 = scmp.eq.s32.totalorder %s18, 0
    %p81 = por %p79, %p80
    %p82 = scmp.ne.s32.totalorder %s70, %s71
    %p83 = scmp.eq.s32.totalorder %s19, 1
    %p84 = por %p82, %p83
    %p86 = scmp.ne.s32.totalorder %s71, %s85
    %p87 = scmp.eq.s32.totalorder %s19, 0
    %p88 = por %p86, %p87
    %s90 = sadd.s32 %s89, 1
    %p93 = scmp.eq.s32.totalorder %s13, 1
    %p94 = scmp.ne.s32.totalorder %s89, %s91
    %p95 = scmp.eq.s32.totalorder %s13, 0
    %p96 = por %p94, %p95
    %p97 = scmp.ne.s32.totalorder %s89, %s91
    %p98 = scmp.eq.s32.totalorder %s18, 1
    %p99 = por %p97, %p98
    %p100 = scmp.ne.s32.totalorder %s91, %s92
    %p101 = scmp.eq.s32.totalorder %s18, 0
    %p102 = por %p100, %p101
    %p103 = scmp.ne.s32.totalorder %s91, %s92
    %p104 = scmp.eq.s32.totalorder %s19, 1
    %p105 = por %p103, %p104
    %p107 = scmp.ne.s32.totalorder %s92, %s106
    %p108 = scmp.eq.s32.totalorder %s19, 0
    %p109 = por %p107, %p108
    %s111 = sadd.s32 %s110, 1
    %p114 = scmp.eq.s32.totalorder %s13, 1
    %p115 = scmp.ne.s32.totalorder %s110, %s112
    %p116 = scmp.eq.s32.totalorder %s13, 0
    %p117 = por %p115, %p116
    %p118 = scmp.ne.s32.totalorder %s110, %s112
    %p119 = scmp.eq.s32.totalorder %s18, 1
    %p120 = por %p118, %p119
    %p121 = scmp.ne.s32.totalorder %s112, %s113
    %p122 = scmp.eq.s32.totalorder %s18, 0
    %p123 = por %p121, %p122
    %p124 = scmp.ne.s32.totalorder %s112, %s113
    %p125 = scmp.eq.s32.totalorder %s19, 1
    %p126 = por %p124, %p125
    %p128 = scmp.ne.s32.totalorder %s113, %s127
    %p129 = scmp.eq.s32.totalorder %s19, 0
    %p130 = por %p128, %p129
    %s132 = sadd.s32 %s131, 1
    %p135 = scmp.eq.s32.totalorder %s13, 1
    %p136 = scmp.ne.s32.totalorder %s131, %s133
    %p137 = scmp.eq.s32.totalorder %s13, 0
    %p138 = por %p136, %p137
    %p139 = scmp.ne.s32.totalorder %s131, %s133
    %p140 = scmp.eq.s32.totalorder %s18, 1
    %p141 = por %p139, %p140
    %p142 = scmp.ne.s32.totalorder %s133, %s134
    %p143 = scmp.eq.s32.totalorder %s18, 0
    %p144 = por %p142, %p143
    %p145 = scmp.ne.s32.totalorder %s133, %s134
    %p146 = scmp.eq.s32.totalorder %s19, 1
    %p147 = por %p145, %p146
    %p149 = scmp.ne.s32.totalorder %s134, %s148
    %p150 = scmp.eq.s32.totalorder %s19, 0
    %p151 = por %p149, %p150
    %s153 = sadd.s32 %s152, 1
    %p156 = scmp.eq.s32.totalorder %s13, 1
    %p157 = scmp.ne.s32.totalorder %s152, %s154
    %p158 = scmp.eq.s32.totalorder %s13, 0
    %p159 = por %p157, %p158
    %p160 = scmp.ne.s32.totalorder %s152, %s154
    %p161 = scmp.eq.s32.totalorder %s18, 1
    %p162 = por %p160, %p161
    %p163 = scmp.ne.s32.totalorder %s154, %s155
    %p164 = scmp.eq.s32.totalorder %s18, 0
    %p165 = por %p163, %p164
    %p166 = scmp.ne.s32.totalorder %s154, %s155
    %p167 = scmp.eq.s32.totalorder %s19, 1
    %p168 = por %p166, %p167
    %p170 = scmp.ne.s32.totalorder %s155, %s169
    %p171 = scmp.eq.s32.totalorder %s19, 0
    %p172 = por %p170, %p171
    %s173 = ssub.s32 %s13, %s20
    %p174 = scmp.eq.s32.totalorder %s173, 0
    %s176 = sadd.s32 %s175, 1
    %s177 = scalar_select %p174, %s175, %s176
    %p180 = pneg %p174
    %p181 = scmp.eq.s32.totalorder %s13, 1
    %p182 = por %p180, %p181
    %p183 = scmp.ne.s32.totalorder %s175, %s178
    %p184 = scmp.eq.s32.totalorder %s13, 0
    %p185 = por %p183, %p184
    %p186 = scmp.ne.s32.totalorder %s175, %s178
    %p187 = scmp.eq.s32.totalorder %s18, 1
    %p188 = por %p186, %p187
    %p189 = scmp.ne.s32.totalorder %s178, %s179
    %p190 = scmp.eq.s32.totalorder %s18, 0
    %p191 = por %p189, %p190
    %p192 = scmp.ne.s32.totalorder %s178, %s179
    %p193 = scmp.eq.s32.totalorder %s19, 1
    %p194 = por %p192, %p193
    %p196 = scmp.ne.s32.totalorder %s179, %s195
    %p197 = scmp.eq.s32.totalorder %s19, 0
    %p198 = por %p196, %p197
    %p199 = scmp.le.s32.totalorder 1, %s13
    %p200 = scmp.lt.s32.totalorder %s13, 3
    %p201 = pnand %p199, %p200
    %p202 = pneg %p201
    // Predicated region
    $region9: #{mlp_forward.1} parent=5 // pred_check
      _
    $region10: #{mlp_forward.1} parent=5 // pred_check_branch
      %204 = sbr.rel (%p201) target = $region12
    $region11: #{mlp_forward.1} parent=5 // pred_region
      %s205 = ssub.s32 %s13, 1
      // Predicated region
      $region13: #{mlp_forward.1} parent=11 // pred_check
        %p206 = pneg %p60
      $region14: #{mlp_forward.1} parent=11 // pred_check_branch
        %208 = sbr.rel (%p206) target = $region16
      $region15: #{mlp_forward.1} parent=11 // pred_region
        _
      $region16: #{mlp_forward.1} parent=11 // pred_fallthru
        _
      // Predicated region
      $region17: #{mlp_forward.1} parent=11 // pred_check
        %p209 = pneg %p81
      $region18: #{mlp_forward.1} parent=11 // pred_check_branch
        %211 = sbr.rel (%p209) target = $region20
      $region19: #{mlp_forward.1} parent=11 // pred_region
        _
      $region20: #{mlp_forward.1} parent=11 // pred_fallthru
        _
      // Predicated region
      $region21: #{mlp_forward.1} parent=11 // pred_check
        %p212 = pneg %p102
      $region22: #{mlp_forward.1} parent=11 // pred_check_branch
        %214 = sbr.rel (%p212) target = $region24
      $region23: #{mlp_forward.1} parent=11 // pred_region
        _
      $region24: #{mlp_forward.1} parent=11 // pred_fallthru
        _
      // Predicated region
      $region25: #{mlp_forward.1} parent=11 // pred_check
        %p215 = pneg %p123
      $region26: #{mlp_forward.1} parent=11 // pred_check_branch
        %217 = sbr.rel (%p215) target = $region28
      $region27: #{mlp_forward.1} parent=11 // pred_region
        _
      $region28: #{mlp_forward.1} parent=11 // pred_fallthru
        _
      // Predicated region
      $region29: #{mlp_forward.1} parent=11 // pred_check
        %p218 = pneg %p144
      $region30: #{mlp_forward.1} parent=11 // pred_check_branch
        %220 = sbr.rel (%p218) target = $region32
      $region31: #{mlp_forward.1} parent=11 // pred_region
        _
      $region32: #{mlp_forward.1} parent=11 // pred_fallthru
        _
      // Predicated region
      $region33: #{mlp_forward.1} parent=11 // pred_check
        %p221 = pneg %p165
      $region34: #{mlp_forward.1} parent=11 // pred_check_branch
        %223 = sbr.rel (%p221) target = $region36
      $region35: #{mlp_forward.1} parent=11 // pred_region
        _
      $region36: #{mlp_forward.1} parent=11 // pred_fallthru
        _
    $region12: #{mlp_forward.1} parent=5 // pred_fallthru
      _
    %p224 = scmp.lt.s32.totalorder %s13, 2
    // Predicated region
    $region37: #{mlp_forward.1} parent=5 // pred_check
      %p225 = pneg %p224
    $region38: #{mlp_forward.1} parent=5 // pred_check_branch
      %227 = sbr.rel (%p225) target = $region40
    $region39: #{mlp_forward.1} parent=5 // pred_region
      // Predicated region
      $region41: #{mlp_forward.1} parent=39 // pred_check
        %p228 = pneg %p33
      $region42: #{mlp_forward.1} parent=39 // pred_check_branch
        %230 = sbr.rel (%p228) target = $region44
      $region43: #{mlp_forward.1} parent=39 // pred_region
        %p231 = scmp.lt.s32.totalorder %s13, 1
        %s232 = scalar_select %p231, %s13, 1
        %s233 = smul.addr %s232, 8
        %s234 = scalar_lea.vmem %s0, %s233
      $region44: #{mlp_forward.1} parent=39 // pred_fallthru
        _
    $region40: #{mlp_forward.1} parent=5 // pred_fallthru
      _
    %p235 = scmp.le.s32.totalorder 1, %s13
    %p236 = scmp.lt.s32.totalorder %s13, 3
    %p237 = pnand %p235, %p236
    %p238 = pneg %p237
    // Predicated region
    $region45: #{mlp_forward.1} parent=5 // pred_check
      _
    $region46: #{mlp_forward.1} parent=5 // pred_check_branch
      %240 = sbr.rel (%p237) target = $region48
    $region47: #{mlp_forward.1} parent=5 // pred_region
      %s241 = ssub.s32 %s13, 1
      %p242 = scmp.lt.s32.totalorder %s18, 1
      %s243 = scalar_select %p242, %s18, 1
      %s244 = smul.addr %s243, 8
      %s245 = scalar_lea.vmem %s0, %s244
      %p246 = pneg %p39
      %p247 = pneg %p36
      %p248 = pneg %p60
      %p249 = pneg %p57
      %p250 = pneg %p81
      %p251 = pneg %p78
      %p252 = pneg %p102
      %p253 = pneg %p99
      %p254 = pneg %p123
      %p255 = pneg %p120
      %p256 = pneg %p144
      %p257 = pneg %p141
      %p258 = pneg %p165
      %p259 = pneg %p162
      %p260 = pneg %p191
      %p261 = pneg %p188
      %p262 = scmp.lt.s32.totalorder %s18, 1
      %s263 = scalar_select %p262, %s18, 1
      %s264 = smul.addr %s263, 8
      %s265 = scalar_lea.vmem %s7, %s264
      %p266 = scmp.lt.s32.totalorder %s18, 1
      %s267 = scalar_select %p266, %s18, 1
      %s268 = smul.addr %s267, 8
      %s269 = scalar_lea.vmem %s0, %s268
      %p270 = scmp.lt.s32.totalorder %s18, 1
      %s271 = scalar_select %p270, %s18, 1
      %s272 = smul.addr %s271, 8
      %s273 = scalar_lea.vmem %s7, %s272
      %v275 = vld [vmem:[%s1] sm:$0xf]
      %v276 = vld [vmem:[%s1 + $0x4] sm:$0xf]
      %v277 = vld [vmem:[%s1 + $0x8] sm:$0xf]
      %v278 = vld [vmem:[%s1 + $0xc] sm:$0xf]
      %v279 = vld [vmem:[%s3] sm:$0xf]
      %v280 = vld [vmem:[%s3 + $0x4] sm:$0xf]
      %v281 = vld [vmem:[%s3 + $0x8] sm:$0xf]
      %v282 = vld [vmem:[%s3 + $0xc] sm:$0xf]
      %v283 = vld [vmem:[%s3 + $0x10] sm:$0xf]
      %v284 = vld [vmem:[%s3 + $0x14] sm:$0xf]
      %v285 = vld [vmem:[%s3 + $0x18] sm:$0xf]
      %v286 = vld [vmem:[%s3 + $0x1c] sm:$0xf]
      %v287 = vld [vmem:[%s3 + $0x20] sm:$0xf]
      %v288 = vld [vmem:[%s3 + $0x24] sm:$0xf]
      %v289 = vld [vmem:[%s3 + $0x28] sm:$0xf]
      %v290 = vld [vmem:[%s3 + $0x2c] sm:$0xf]
      %v291 = vld [vmem:[%s3 + $0x30] sm:$0xf]
      %v292 = vld [vmem:[%s3 + $0x34] sm:$0xf]
      %v293 = vld [vmem:[%s3 + $0x38] sm:$0xf]
      %v294 = vld [vmem:[%s3 + $0x3c] sm:$0xf]
      %v295 = vld [vmem:[%s5] sm:$0xf]
      %v296 = vld [vmem:[%s5 + $0x4] sm:$0xf]
      %v297 = vld [vmem:[%s5 + $0x8] sm:$0xf]
      %v298 = vld [vmem:[%s5 + $0xc] sm:$0xf]
      %v299 = vld [vmem:[%s5 + $0x10] sm:$0xf]
      %v300 = vld [vmem:[%s5 + $0x14] sm:$0xf]
      %v301 = vld [vmem:[%s5 + $0x18] sm:$0xf]
      %v302 = vld [vmem:[%s5 + $0x1c] sm:$0xf]
      %v303 = vld [vmem:[%s5 + $0x20] sm:$0xf]
      %v304 = vld [vmem:[%s5 + $0x24] sm:$0xf]
      %v305 = vld [vmem:[%s5 + $0x28] sm:$0xf]
      %v306 = vld [vmem:[%s5 + $0x2c] sm:$0xf]
      %v307 = vld [vmem:[%s5 + $0x30] sm:$0xf]
      %v308 = vld [vmem:[%s5 + $0x34] sm:$0xf]
      %v309 = vld [vmem:[%s5 + $0x38] sm:$0xf]
      %v310 = vld [vmem:[%s5 + $0x3c] sm:$0xf]
      %v311 = vld [vmem:[%s2] sm:$0x1]
      %v312 = vld [vmem:[%s4] sm:$0x1]
      %v313 = vld [vmem:[%s6] sm:$0x1]
      %v314 = vld [vmem:[%s269] sm:$0xff]
      %v315 = vpack.c.bf16 %v314, %v314
      %v317 = vlaneseq
      %v318 = vshrl.u32 %v317, 7
      %v319 = vsub.s32 0, %v318
      %v320 = vrot.slane %v311, %v319
      %v326 = vunpack.c.l.b16 %v275
      %v327 = vunpack.c.l.b16 %v276
      %v328 = vunpack.c.l.b16 %v277
      %v329 = vunpack.c.l.b16 %v278
      %v330 = vpack.c.b16 %v327, %v326
      %v331 = vpack.c.b16 %v329, %v328
      %vm334 = vcmask 261120
      %v336 = vsel %vm334, %v315, 0
      %338 = vmatprep.subr.bf16.mxu0 0
      %339 = vmatpush1.bf16.msra.mxu0 %v330
      %340 = vmatprep.subr.bf16.mxu0 0
      %341 = vmatpush1.bf16.msra.mxu0 %v331
      %342 = vmatprep.subr.bf16.mxu0 0
      %343 = vmatpush1.bf16.msra.mxu0 0
      %344 = vmatprep.subr.bf16.mxu0 0
      %345 = vmatpush1.bf16.msra.mxu0 0
      %346 = vmatprep.subr.bf16.mxu0 0
      %347 = vmatpush1.bf16.msra.mxu0 0
      %348 = vmatprep.subr.bf16.mxu0 0
      %349 = vmatpush1.bf16.msra.mxu0 0
      %350 = vmatprep.subr.bf16.mxu0 0
      %351 = vmatpush1.bf16.msra.mxu0 0
      %352 = vmatprep.subr.bf16.mxu0 0
      %353 = vmatpush1.bf16.msra.mxu0 0
      %354 = vmatprep.subr.bf16.mxu0 0
      %355 = vmatpush1.bf16.msra.mxu0 0
      %356 = vmatprep.subr.bf16.mxu0 0
      %357 = vmatpush1.bf16.msra.mxu0 0
      %358 = vmatprep.subr.bf16.mxu0 0
      %359 = vmatpush1.bf16.msra.mxu0 0
      %360 = vmatprep.subr.bf16.mxu0 0
      %361 = vmatpush1.bf16.msra.mxu0 0
      %362 = vmatprep.subr.bf16.mxu0 0
      %363 = vmatpush1.bf16.msra.mxu0 0
      %364 = vmatprep.subr.bf16.mxu0 0
      %365 = vmatpush1.bf16.msra.mxu0 0
      %366 = vmatprep.subr.bf16.mxu0 0
      %367 = vmatpush1.bf16.msra.mxu0 0
      %368 = vmatprep.subr.bf16.mxu0 0
      %369 = vmatpush1.bf16.msra.mxu0 0
      %370 = vmatprep.mubr.bf16.mxu0 0
      %371 = vmatmul.mubr.bf16.gmra.mrb[0].mxu0 %v336
      %v372 = vpop.f32.mrb[0].mxu0
      %v373 = vadd.f32 %v320, %v372
      %v374 = vpop.f32.mrb[0].mxu0
      %v375 = vpop.f32.mrb[0].mxu0
      %v376 = vpop.f32.mrb[0].mxu0
      %377 = vdwg.mxu0
      %v378 = vmul.f32 %v373, 0.5
      %v379 = vmul.f32 %v373, %v373
      %v380 = vmul.f32 %v379, %v373
      %v381 = vmul.f32 %v380, 0.044715
      %v382 = vadd.f32 %v373, %v381
      %v383 = vmul.f32 %v382, 0.7978846
      %v384 = vtanh.pop %v383
      %v385 = vadd.f32 %v384, 1.0
      %v386 = vmul.f32 %v378, %v385
      %v387 = vpack.c.bf16 %v386, %v386
      %v389 = vlaneseq
      %v390 = vshrl.u32 %v389, 7
      %v391 = vsub.s32 0, %v390
      %v392 = vrot.slane %v312, %v391
      %v410 = vunpack.c.l.b16 %v279
      %v411 = vunpack.c.l.b16 %v280
      %v412 = vunpack.c.l.b16 %v281
      %v413 = vunpack.c.l.b16 %v282
      %v414 = vunpack.c.l.b16 %v283
      %v415 = vunpack.c.l.b16 %v284
      %v416 = vunpack.c.l.b16 %v285
      %v417 = vunpack.c.l.b16 %v286
      %v418 = vunpack.c.l.b16 %v287
      %v419 = vunpack.c.l.b16 %v288
      %v420 = vunpack.c.l.b16 %v289
      %v421 = vunpack.c.l.b16 %v290
      %v422 = vunpack.c.l.b16 %v291
      %v423 = vunpack.c.l.b16 %v292
      %v424 = vunpack.c.l.b16 %v293
      %v425 = vunpack.c.l.b16 %v294
      %v426 = vpack.c.b16 %v411, %v410
      %v427 = vpack.c.b16 %v413, %v412
      %v428 = vpack.c.b16 %v415, %v414
      %v429 = vpack.c.b16 %v417, %v416
      %v430 = vpack.c.b16 %v419, %v418
      %v431 = vpack.c.b16 %v421, %v420
      %v432 = vpack.c.b16 %v423, %v422
      %v433 = vpack.c.b16 %v425, %v424
      %442 = vmatprep.subr.bf16.mxu0 0
      %443 = vmatpush1.bf16.msra.mxu0 %v426
      %444 = vmatprep.subr.bf16.mxu0 0
      %445 = vmatpush1.bf16.msra.mxu0 %v427
      %446 = vmatprep.subr.bf16.mxu0 0
      %447 = vmatpush1.bf16.msra.mxu0 %v428
      %448 = vmatprep.subr.bf16.mxu0 0
      %449 = vmatpush1.bf16.msra.mxu0 %v429
      %450 = vmatprep.subr.bf16.mxu0 0
      %451 = vmatpush1.bf16.msra.mxu0 %v430
      %452 = vmatprep.subr.bf16.mxu0 0
      %453 = vmatpush1.bf16.msra.mxu0 %v431
      %454 = vmatprep.subr.bf16.mxu0 0
      %455 = vmatpush1.bf16.msra.mxu0 %v432
      %456 = vmatprep.subr.bf16.mxu0 0
      %457 = vmatpush1.bf16.msra.mxu0 %v433
      %458 = vmatprep.subr.bf16.mxu0 0
      %459 = vmatpush1.bf16.msra.mxu0 0
      %460 = vmatprep.subr.bf16.mxu0 0
      %461 = vmatpush1.bf16.msra.mxu0 0
      %462 = vmatprep.subr.bf16.mxu0 0
      %463 = vmatpush1.bf16.msra.mxu0 0
      %464 = vmatprep.subr.bf16.mxu0 0
      %465 = vmatpush1.bf16.msra.mxu0 0
      %466 = vmatprep.subr.bf16.mxu0 0
      %467 = vmatpush1.bf16.msra.mxu0 0
      %468 = vmatprep.subr.bf16.mxu0 0
      %469 = vmatpush1.bf16.msra.mxu0 0
      %470 = vmatprep.subr.bf16.mxu0 0
      %471 = vmatpush1.bf16.msra.mxu0 0
      %472 = vmatprep.subr.bf16.mxu0 0
      %473 = vmatpush1.bf16.msra.mxu0 0
      %474 = vmatprep.mubr.bf16.mxu0 0
      %475 = vmatmul.mubr.bf16.gmra.mrb[0].mxu0 %v387
      %v476 = vpop.f32.mrb[0].mxu0
      %v477 = vadd.f32 %v392, %v476
      %v478 = vpop.f32.mrb[0].mxu0
      %v479 = vpop.f32.mrb[0].mxu0
      %v480 = vpop.f32.mrb[0].mxu0
      %481 = vdwg.mxu0
      %v482 = vmul.f32 %v477, 0.5
      %v483 = vmul.f32 %v477, %v477
      %v484 = vmul.f32 %v483, %v477
      %v485 = vmul.f32 %v484, 0.044715
      %v486 = vadd.f32 %v477, %v485
      %v487 = vmul.f32 %v486, 0.7978846
      %v488 = vtanh.pop %v487
      %v489 = vadd.f32 %v488, 1.0
      %v490 = vmul.f32 %v482, %v489
      %v491 = vpack.c.bf16 %v490, %v490
      %v493 = vlaneseq
      %v494 = vshrl.u32 %v493, 7
      %v495 = vsub.s32 0, %v494
      %v496 = vrot.slane %v313, %v495
      %v514 = vunpack.c.l.b16 %v295
      %v515 = vunpack.c.l.b16 %v296
      %v516 = vunpack.c.l.b16 %v297
      %v517 = vunpack.c.l.b16 %v298
      %v518 = vunpack.c.l.b16 %v299
      %v519 = vunpack.c.l.b16 %v300
      %v520 = vunpack.c.l.b16 %v301
      %v521 = vunpack.c.l.b16 %v302
      %v522 = vunpack.c.l.b16 %v303
      %v523 = vunpack.c.l.b16 %v304
      %v524 = vunpack.c.l.b16 %v305
      %v525 = vunpack.c.l.b16 %v306
      %v526 = vunpack.c.l.b16 %v307
      %v527 = vunpack.c.l.b16 %v308
      %v528 = vunpack.c.l.b16 %v309
      %v529 = vunpack.c.l.b16 %v310
      %v530 = vpack.c.b16 %v515, %v514
      %v531 = vpack.c.b16 %v517, %v516
      %v532 = vpack.c.b16 %v519, %v518
      %v533 = vpack.c.b16 %v521, %v520
      %v534 = vpack.c.b16 %v523, %v522
      %v535 = vpack.c.b16 %v525, %v524
      %v536 = vpack.c.b16 %v527, %v526
      %v537 = vpack.c.b16 %v529, %v528
      %546 = vmatprep.subr.bf16.mxu0 0
      %547 = vmatpush1.bf16.msra.mxu0 %v530
      %548 = vmatprep.subr.bf16.mxu0 0
      %549 = vmatpush1.bf16.msra.mxu0 %v531
      %550 = vmatprep.subr.bf16.mxu0 0
      %551 = vmatpush1.bf16.msra.mxu0 %v532
      %552 = vmatprep.subr.bf16.mxu0 0
      %553 = vmatpush1.bf16.msra.mxu0 %v533
      %554 = vmatprep.subr.bf16.mxu0 0
      %555 = vmatpush1.bf16.msra.mxu0 %v534
      %556 = vmatprep.subr.bf16.mxu0 0
      %557 = vmatpush1.bf16.msra.mxu0 %v535
      %558 = vmatprep.subr.bf16.mxu0 0
      %559 = vmatpush1.bf16.msra.mxu0 %v536
      %560 = vmatprep.subr.bf16.mxu0 0
      %561 = vmatpush1.bf16.msra.mxu0 %v537
      %562 = vmatprep.subr.bf16.mxu0 0
      %563 = vmatpush1.bf16.msra.mxu0 0
      %564 = vmatprep.subr.bf16.mxu0 0
      %565 = vmatpush1.bf16.msra.mxu0 0
      %566 = vmatprep.subr.bf16.mxu0 0
      %567 = vmatpush1.bf16.msra.mxu0 0
      %568 = vmatprep.subr.bf16.mxu0 0
      %569 = vmatpush1.bf16.msra.mxu0 0
      %570 = vmatprep.subr.bf16.mxu0 0
      %571 = vmatpush1.bf16.msra.mxu0 0
      %572 = vmatprep.subr.bf16.mxu0 0
      %573 = vmatpush1.bf16.msra.mxu0 0
      %574 = vmatprep.subr.bf16.mxu0 0
      %575 = vmatpush1.bf16.msra.mxu0 0
      %576 = vmatprep.subr.bf16.mxu0 0
      %577 = vmatpush1.bf16.msra.mxu0 0
      %578 = vmatprep.mubr.bf16.mxu0 0
      %579 = vmatmul.mubr.bf16.gmra.mrb[0].mxu0 %v491
      %v580 = vpop.f32.mrb[0].mxu0
      %v581 = vadd.f32 %v496, %v580
      %v582 = vpop.f32.mrb[0].mxu0
      %v583 = vpop.f32.mrb[0].mxu0
      %v584 = vpop.f32.mrb[0].mxu0
      %585 = vdwg.mxu0
      %586 = vst [vmem:[%s273] sm:$0xff] %v581
      %p587 = scmp.lt.s32.totalorder %s18, 1
      %s588 = scalar_select %p587, %s18, 1
      %s589 = smul.addr %s588, 8
      %s590 = scalar_lea.vmem %s7, %s589
      // Predicated region
      $region49: #{mlp_forward.1} parent=47 // pred_check
        %p591 = pneg %p188
      $region50: #{mlp_forward.1} parent=47 // pred_check_branch
        %593 = sbr.rel (%p591) target = $region52
      $region51: #{mlp_forward.1} parent=47 // pred_region
        _
      $region52: #{mlp_forward.1} parent=47 // pred_fallthru
        _
    $region48: #{mlp_forward.1} parent=5 // pred_fallthru
      _
    %p594 = scmp.le.s32.totalorder 2, %s13
    // Predicated region
    $region53: #{mlp_forward.1} parent=5 // pred_check
      %p595 = pneg %p594
    $region54: #{mlp_forward.1} parent=5 // pred_check_branch
      %597 = sbr.rel (%p595) target = $region56
    $region55: #{mlp_forward.1} parent=5 // pred_region
      %s598 = ssub.s32 %s13, 2
      // Predicated region
      $region57: #{mlp_forward.1} parent=55 // pred_check
        %p599 = pneg %p194
      $region58: #{mlp_forward.1} parent=55 // pred_check_branch
        %601 = sbr.rel (%p599) target = $region60
      $region59: #{mlp_forward.1} parent=55 // pred_region
        %p602 = scmp.lt.s32.totalorder %s19, 1
        %s603 = scalar_select %p602, %s19, 1
        %s604 = smul.addr %s603, 8
        %s605 = scalar_lea.vmem %s7, %s604
      $region60: #{mlp_forward.1} parent=55 // pred_fallthru
        _
    $region56: #{mlp_forward.1} parent=5 // pred_fallthru
      _
  $region6: #{mlp_forward.1} parent=0 // loop_footer
    %s17 = sadd.s32 1, %s13
  $region7: #{mlp_forward.1} parent=0 // loop_footer_branch
    %12 = sbr.rel target = $region3
  $region8: #{mlp_forward.1} parent=0 // loop_exit
    _

</llo_original>
